<compile_context>
chip_gen: v7x
topology: tpu7x:2x2x1
jax: 0.10.0
libtpu: 0.0.40
codegen_flags: <defaults>
</compile_context>

<pallas_src>
import functools

import jax
import jax.numpy as jnp
from jax.experimental import pallas as pl
from jax.experimental.pallas import tpu as pltpu

# Logical model dimensions (Net(n_feature, n_hidden1..4, n_output)).
N_FEATURE = 16
N_HIDDEN1 = 32
N_HIDDEN2 = 32
N_HIDDEN3 = 16
N_HIDDEN4 = 16
N_OUTPUT = 8

BATCH = 16

LANE = 128          # hidden dims zero-padded to one full vreg lane width
SMALL_BATCH = 256   # below this: a single grid step (overhead-minimal)
MAX_TILE_B = 2048   # cap on rows per grid step for large batches


def _round_up(x, m):
    return (x + m - 1) // m * m


def _pad2d(a, rows, cols):
    return jnp.pad(a, ((0, rows - a.shape[0]), (0, cols - a.shape[1])))


# ---------------------------------------------------------------------------
# Kernel
# ---------------------------------------------------------------------------
def mlp_kernel(x_ref, w1_ref, wrest_ref, b_ref, o_ref):
    """x:(tb,16)  w1:(16,128)  wrest:(512,128)=[W2;W3;W4;W5]  b:(8,128)  o:(tb,8)."""

    def layer(h, w, l, relu):
        y = jnp.dot(h, w, preferred_element_type=jnp.float32) + b_ref[l:l + 1, :]
        return jnp.maximum(y, 0.0) if relu else y

    h = layer(x_ref[...], w1_ref[...], 0, True)               # K=16 first matmul
    h = layer(h, wrest_ref[0 * LANE:1 * LANE, :], 1, True)    # static ref slices:
    h = layer(h, wrest_ref[1 * LANE:2 * LANE, :], 2, True)    # zero-cost views
    h = layer(h, wrest_ref[2 * LANE:3 * LANE, :], 3, True)
    y = layer(h, wrest_ref[3 * LANE:4 * LANE, :], 4, False)
    # TODO(synk): optionally pack 16 rows x 8 cols into one 128-lane row for a
    # fully unmasked vst; the (tb, 8) store below already cuts write bytes 16x.
    o_ref[...] = y[:, :N_OUTPUT]


# ---------------------------------------------------------------------------
# Parameters
# ---------------------------------------------------------------------------
def make_params(key):
    """Deterministic init matching PyTorch Linear's U(-1/sqrt(fan_in), ...)."""
    dims = [(N_FEATURE, N_HIDDEN1), (N_HIDDEN1, N_HIDDEN2),
            (N_HIDDEN2, N_HIDDEN3), (N_HIDDEN3, N_HIDDEN4),
            (N_HIDDEN4, N_OUTPUT)]
    params = []
    for fan_in, fan_out in dims:
        key, kw, kb = jax.random.split(key, 3)
        bound = 1.0 / jnp.sqrt(jnp.float32(fan_in))
        w = jax.random.uniform(kw, (fan_in, fan_out), jnp.float32, -bound, bound)
        b = jax.random.uniform(kb, (1, fan_out), jnp.float32, -bound, bound)
        params.append((w, b))
    return params


def prepare_params(params):
    """One-time fuse/pad of the 5 (W, b) pairs into 3 resident kernel inputs."""
    (w1, _), rest = params[0], params[1:]
    w1_p = _pad2d(w1.astype(jnp.float32), N_FEATURE, LANE)                  # (16, 128)
    wrest = jnp.concatenate(
        [_pad2d(w.astype(jnp.float32), LANE, LANE) for (w, _) in rest], axis=0)  # (512, 128)
    b_all = jnp.zeros((8, LANE), jnp.float32)
    for i, (_, b) in enumerate(params):
        b_all = b_all.at[i, :b.shape[1]].set(b[0].astype(jnp.float32))      # (8, 128)
    return w1_p, wrest, b_all


# ---------------------------------------------------------------------------
# Forward
# ---------------------------------------------------------------------------
def _choose_tiling(B):
    if B <= SMALL_BATCH:
        return 1, B                              # pay the pipeline prologue once
    n_steps = max(2, pl.cdiv(B, MAX_TILE_B))     # >= 2 parallel steps: both v7x TCs busy
    return n_steps, _round_up(pl.cdiv(B, n_steps), 8)


@jax.jit
def mlp_forward(x, w1_p, wrest, b_all):
    B = x.shape[0]
    n_steps, tile_b = _choose_tiling(B)
    b_pad = n_steps * tile_b

    xp = x.astype(jnp.float32)
    if b_pad != B:                               # only pads when batch is tiled
        xp = jnp.pad(xp, ((0, b_pad - B), (0, 0)))

    resident = dict(pipeline_mode=pl.Buffered(buffer_count=1))  # constant block index
    out = pl.pallas_call(
        mlp_kernel,
        out_shape=jax.ShapeDtypeStruct((b_pad, N_OUTPUT), jnp.float32),
        grid_spec=pl.GridSpec(
            grid=(n_steps,),
            in_specs=[
                pl.BlockSpec((tile_b, N_FEATURE), lambda i: (i, 0)),
                pl.BlockSpec((N_FEATURE, LANE), lambda i: (0, 0), **resident),
                pl.BlockSpec((4 * LANE, LANE), lambda i: (0, 0), **resident),
                pl.BlockSpec((8, LANE), lambda i: (0, 0), **resident),
            ],
            out_specs=pl.BlockSpec((tile_b, N_OUTPUT), lambda i: (i, 0)),
        ),
        compiler_params=pltpu.CompilerParams(
            # Single step: "arbitrary" so trivial work isn't sharded across TCs;
            # real batch tiling (>= 2 steps) is "parallel" for megacore.
            dimension_semantics=("arbitrary",) if n_steps == 1 else ("parallel",)),
    )(xp, w1_p, wrest, b_all)

    return out if b_pad == B else out[:B]


def mlp_reference(x, params):
    h = x
    for i, (w, b) in enumerate(params):
        h = h @ w + b
        if i < len(params) - 1:
            h = jnp.maximum(h, 0.0)
    return h


if __name__ == "__main__":
    key = jax.random.PRNGKey(0)
    key, kx = jax.random.split(key)
    x = jax.random.normal(kx, (BATCH, N_FEATURE), jnp.float32)

    params = make_params(key)
    w1_p, wrest, b_all = prepare_params(params)   # one-time prep, outside the forward

    out = jax.block_until_ready(mlp_forward(x, w1_p, wrest, b_all))

    ref = mlp_reference(x, params)
    assert out.shape == (BATCH, N_OUTPUT)
    assert jnp.allclose(out, ref, atol=1e-5, rtol=1e-5)
    print("KERNEL_OK")
</pallas_src>

<mosaic_0001>
module attributes {stable_mosaic.version = 11 : i64} {
  func.func @mlp_kernel(%arg0: i32, %arg1: memref<16x16xf32, #tpu.memory_space<vmem>>, %arg2: memref<16x128xf32, #tpu.memory_space<vmem>>, %arg3: memref<512x128xf32, #tpu.memory_space<vmem>>, %arg4: memref<8x128xf32, #tpu.memory_space<vmem>>, %arg5: memref<16x8xf32, #tpu.memory_space<vmem>>) attributes {dimension_semantics = [#tpu.dimension_semantics<arbitrary>], iteration_bounds = array<i64: 1>, scalar_prefetch = 0 : i64, scratch_operands = 0 : i64, tpu.core_type = #tpu.core_type<tc>, window_params = [{transform_indices = @transform_0, window_bounds = array<i64: 16, 16>}, {pipeline_mode = #tpu.pipeline_mode<synchronous>, transform_indices = @transform_1, window_bounds = array<i64: 16, 128>}, {pipeline_mode = #tpu.pipeline_mode<synchronous>, transform_indices = @transform_2, window_bounds = array<i64: 512, 128>}, {pipeline_mode = #tpu.pipeline_mode<synchronous>, transform_indices = @transform_3, window_bounds = array<i64: 8, 128>}, {transform_indices = @transform_4, window_bounds = array<i64: 16, 8>}]} {
    %c0 = arith.constant 0 : index
    %c0_0 = arith.constant 0 : index
    %0 = vector.load %arg1[%c0, %c0_0] : memref<16x16xf32, #tpu.memory_space<vmem>>, vector<16x16xf32>
    %c0_1 = arith.constant 0 : index
    %c0_2 = arith.constant 0 : index
    %1 = vector.load %arg2[%c0_1, %c0_2] : memref<16x128xf32, #tpu.memory_space<vmem>>, vector<16x128xf32>
    %cst = arith.constant dense<0.000000e+00> : vector<16x128xf32>
    %2 = tpu.matmul %0, %1, %cst {dimension_numbers = #tpu.dot_dimension_numbers<[1], [0], [0], [1], [0, 0, 1, 1], [], []>} : vector<16x16xf32>, vector<16x128xf32>, vector<16x128xf32> -> vector<16x128xf32>
    %c0_3 = arith.constant 0 : index
    %c0_4 = arith.constant 0 : index
    %3 = vector.load %arg4[%c0_3, %c0_4] : memref<8x128xf32, #tpu.memory_space<vmem>>, vector<1x128xf32>
    %4 = vector.broadcast %3 : vector<1x128xf32> to vector<16x128xf32>
    %5 = arith.addf %2, %4 : vector<16x128xf32>
    %cst_5 = arith.constant 0.000000e+00 : f32
    %6 = vector.broadcast %cst_5 : f32 to vector<16x128xf32>
    %7 = arith.maximumf %5, %6 : vector<16x128xf32>
    %c0_6 = arith.constant 0 : index
    %c0_7 = arith.constant 0 : index
    %8 = vector.load %arg3[%c0_6, %c0_7] : memref<512x128xf32, #tpu.memory_space<vmem>>, vector<128x128xf32>
    %cst_8 = arith.constant dense<0.000000e+00> : vector<16x128xf32>
    %9 = tpu.matmul %7, %8, %cst_8 {dimension_numbers = #tpu.dot_dimension_numbers<[1], [0], [0], [1], [0, 0, 1, 1], [], []>} : vector<16x128xf32>, vector<128x128xf32>, vector<16x128xf32> -> vector<16x128xf32>
    %c1 = arith.constant 1 : index
    %c0_9 = arith.constant 0 : index
    %10 = vector.load %arg4[%c1, %c0_9] : memref<8x128xf32, #tpu.memory_space<vmem>>, vector<1x128xf32>
    %11 = vector.broadcast %10 : vector<1x128xf32> to vector<16x128xf32>
    %12 = arith.addf %9, %11 : vector<16x128xf32>
    %cst_10 = arith.constant 0.000000e+00 : f32
    %13 = vector.broadcast %cst_10 : f32 to vector<16x128xf32>
    %14 = arith.maximumf %12, %13 : vector<16x128xf32>
    %c128 = arith.constant 128 : index
    %c0_11 = arith.constant 0 : index
    %15 = vector.load %arg3[%c128, %c0_11] : memref<512x128xf32, #tpu.memory_space<vmem>>, vector<128x128xf32>
    %cst_12 = arith.constant dense<0.000000e+00> : vector<16x128xf32>
    %16 = tpu.matmul %14, %15, %cst_12 {dimension_numbers = #tpu.dot_dimension_numbers<[1], [0], [0], [1], [0, 0, 1, 1], [], []>} : vector<16x128xf32>, vector<128x128xf32>, vector<16x128xf32> -> vector<16x128xf32>
    %c2 = arith.constant 2 : index
    %c0_13 = arith.constant 0 : index
    %17 = vector.load %arg4[%c2, %c0_13] : memref<8x128xf32, #tpu.memory_space<vmem>>, vector<1x128xf32>
    %18 = vector.broadcast %17 : vector<1x128xf32> to vector<16x128xf32>
    %19 = arith.addf %16, %18 : vector<16x128xf32>
    %cst_14 = arith.constant 0.000000e+00 : f32
    %20 = vector.broadcast %cst_14 : f32 to vector<16x128xf32>
    %21 = arith.maximumf %19, %20 : vector<16x128xf32>
    %c256 = arith.constant 256 : index
    %c0_15 = arith.constant 0 : index
    %22 = vector.load %arg3[%c256, %c0_15] : memref<512x128xf32, #tpu.memory_space<vmem>>, vector<128x128xf32>
    %cst_16 = arith.constant dense<0.000000e+00> : vector<16x128xf32>
    %23 = tpu.matmul %21, %22, %cst_16 {dimension_numbers = #tpu.dot_dimension_numbers<[1], [0], [0], [1], [0, 0, 1, 1], [], []>} : vector<16x128xf32>, vector<128x128xf32>, vector<16x128xf32> -> vector<16x128xf32>
    %c3 = arith.constant 3 : index
    %c0_17 = arith.constant 0 : index
    %24 = vector.load %arg4[%c3, %c0_17] : memref<8x128xf32, #tpu.memory_space<vmem>>, vector<1x128xf32>
    %25 = vector.broadcast %24 : vector<1x128xf32> to vector<16x128xf32>
    %26 = arith.addf %23, %25 : vector<16x128xf32>
    %cst_18 = arith.constant 0.000000e+00 : f32
    %27 = vector.broadcast %cst_18 : f32 to vector<16x128xf32>
    %28 = arith.maximumf %26, %27 : vector<16x128xf32>
    %c384 = arith.constant 384 : index
    %c0_19 = arith.constant 0 : index
    %29 = vector.load %arg3[%c384, %c0_19] : memref<512x128xf32, #tpu.memory_space<vmem>>, vector<128x128xf32>
    %cst_20 = arith.constant dense<0.000000e+00> : vector<16x128xf32>
    %30 = tpu.matmul %28, %29, %cst_20 {dimension_numbers = #tpu.dot_dimension_numbers<[1], [0], [0], [1], [0, 0, 1, 1], [], []>} : vector<16x128xf32>, vector<128x128xf32>, vector<16x128xf32> -> vector<16x128xf32>
    %c4 = arith.constant 4 : index
    %c0_21 = arith.constant 0 : index
    %31 = vector.load %arg4[%c4, %c0_21] : memref<8x128xf32, #tpu.memory_space<vmem>>, vector<1x128xf32>
    %32 = vector.broadcast %31 : vector<1x128xf32> to vector<16x128xf32>
    %33 = arith.addf %30, %32 : vector<16x128xf32>
    %34 = vector.extract_strided_slice %33 {offsets = [0, 0], sizes = [16, 8], strides = [1, 1]} : vector<16x128xf32> to vector<16x8xf32>
    %c0_22 = arith.constant 0 : index
    %c0_23 = arith.constant 0 : index
    %35 = vector.load %arg5[%c0_22, %c0_23] : memref<16x8xf32, #tpu.memory_space<vmem>>, vector<16x8xf32>
    tpu.vector_store %arg5[%c0_22, %c0_23], %34 {strides = array<i32>} : memref<16x8xf32, #tpu.memory_space<vmem>>, vector<16x8xf32>,
    return
  }
  func.func @transform_0(%arg0: i32) -> (i32, i32) {
    %c0_i32 = arith.constant 0 : i32
    %c0_i32_0 = arith.constant 0 : i32
    return %arg0, %c0_i32 : i32, i32
  }
  func.func @transform_1(%arg0: i32) -> (i32, i32) {
    %c0_i32 = arith.constant 0 : i32
    %c0_i32_0 = arith.constant 0 : i32
    %c0_i32_1 = arith.constant 0 : i32
    return %c0_i32, %c0_i32_0 : i32, i32
  }
  func.func @transform_2(%arg0: i32) -> (i32, i32) {
    %c0_i32 = arith.constant 0 : i32
    %c0_i32_0 = arith.constant 0 : i32
    %c0_i32_1 = arith.constant 0 : i32
    return %c0_i32, %c0_i32_0 : i32, i32
  }
  func.func @transform_3(%arg0: i32) -> (i32, i32) {
    %c0_i32 = arith.constant 0 : i32
    %c0_i32_0 = arith.constant 0 : i32
    %c0_i32_1 = arith.constant 0 : i32
    return %c0_i32, %c0_i32_0 : i32, i32
  }
  func.func @transform_4(%arg0: i32) -> (i32, i32) {
    %c0_i32 = arith.constant 0 : i32
    %c0_i32_0 = arith.constant 0 : i32
    return %arg0, %c0_i32 : i32, i32
  }
}

</mosaic_0001>

<llo_original>
// kernel: mlp_forward.1
$region0: #{mlp_forward.1}
  #allocation0 [shape = 'u32[]', space=smem, size = 0x4, offset = 0x4, fixed_abs, tag = 'smem constant byte address 0x4 - core index']
  #allocation1 [shape = 'u32[144,128]{1,0:T(1,128)}', space=vmem, size = 0x12000, scoped, tag = 'internal scratch']
  %s0 = inlined_call_operand.hbm [shape: f32[16,16], index: 0, kind: input, shape index: {}]
  %s1 = inlined_call_operand.hbm [shape: f32[16,128], index: 1, kind: input, shape index: {}]
  %s2 = inlined_call_operand.hbm [shape: f32[512,128], index: 2, kind: input, shape index: {}]
  %s3 = inlined_call_operand.vmem [shape: f32[8,128], index: 3, kind: input, shape index: {}]
  %s4 = inlined_call_operand.vmem [shape: f32[16,8], index: 4, kind: output, shape index: {}]
  %s5 = sld [smem:[#allocation0]]
  $region38: #{mlp_forward.1} parent=0
    _
  %s7 = ssub.s32 1, %s5
  %s8 = scalar_select 0, %s7, %s5
  $region1: #{mlp_forward.1} parent=0
    #allocation2 [shape = 'u8[8192]{0}', space=vmem, size = 0x2000, scoped, tag = 'input window, operand 0, single buffered']
    #allocation3 [shape = 's32[1]{0}', space=sflag, size = 0x4, scoped, tag = 'scoped memory for mlp_forward.1']
    #allocation4 [shape = 'u8[8192]{0}', space=vmem, size = 0x2000, scoped, tag = 'input window, operand 1, single buffered']
    #allocation5 [shape = 's32[1]{0}', space=sflag, size = 0x4, scoped, tag = 'scoped memory for mlp_forward.1']
    #allocation6 [shape = 'u8[262144]{0}', space=vmem, size = 0x40000, scoped, tag = 'input window, operand 2, single buffered']
    %9 = vsyncpa [#allocation3], 0
    %10 = vsyncpa [#allocation5], 0
    // Predicated region
    $region2: #{mlp_forward.1} parent=1 // pred_check
      _
    $region3: #{mlp_forward.1} parent=1 // pred_check_branch
      %12 = sbr.rel (0) target = $region5
    $region4: #{mlp_forward.1} parent=1 // pred_region
      %s14 = ssub.s32 256, 256
      %15 = vsyncadd [#allocation3], %s14
      %s16 = sshll.u32 [#allocation2], 4
      %s17 = int_to_ptr.vmem [resolvable:$true] %s16
      %22 = dma.hbm_to_vmem [thread:$0]  %s0, 256, %s17, [#allocation3], 128, 128, 8
    $region5: #{mlp_forward.1} parent=1 // pred_fallthru
      _
    // Predicated region
    $region6: #{mlp_forward.1} parent=1 // pred_check
      _
    $region7: #{mlp_forward.1} parent=1 // pred_check_branch
      %24 = sbr.rel (0) target = $region9
    $region8: #{mlp_forward.1} parent=1 // pred_region
      %s26 = ssub.s32 256, 256
      %27 = vsyncadd [#allocation5], %s26
      %s28 = sshll.u32 [#allocation4], 4
      %s29 = int_to_ptr.vmem [resolvable:$true] %s28
      %34 = dma.hbm_to_vmem [thread:$0]  %s1, 256, %s29, [#allocation5], 128, 128, 8
    $region9: #{mlp_forward.1} parent=1 // pred_fallthru
      _
    // Predicated region
    $region10: #{mlp_forward.1} parent=1 // pred_check
      _
    $region11: #{mlp_forward.1} parent=1 // pred_check_branch
      %36 = sbr.rel (0) target = $region13
    $region12: #{mlp_forward.1} parent=1 // pred_region
      %s38 = ssub.s32 8192, 8192
      %39 = vsyncadd [#allocation5], %s38
      %s40 = sshll.u32 [#allocation6], 4
      %s41 = int_to_ptr.vmem [resolvable:$true] %s40
      %46 = dma.hbm_to_vmem [thread:$0]  %s2, 8192, %s41, [#allocation5], 128, 128, 8
    $region13: #{mlp_forward.1} parent=1 // pred_fallthru
      _
    // Predicated region
    $region14: #{mlp_forward.1} parent=1 // pred_check
      _
    $region15: #{mlp_forward.1} parent=1 // pred_check_branch
      %48 = sbr.rel (0) target = $region17
    $region16: #{mlp_forward.1} parent=1 // pred_region
      _
    $region17: #{mlp_forward.1} parent=1 // pred_fallthru
      _
    // Predicated region
    $region18: #{mlp_forward.1} parent=1 // pred_check
      _
    $region19: #{mlp_forward.1} parent=1 // pred_check_branch
      %50 = sbr.rel (0) target = $region21
    $region20: #{mlp_forward.1} parent=1 // pred_region
      %51 = dma.done [#allocation3], 256
    $region21: #{mlp_forward.1} parent=1 // pred_fallthru
      _
    // Predicated region
    $region22: #{mlp_forward.1} parent=1 // pred_check
      _
    $region23: #{mlp_forward.1} parent=1 // pred_check_branch
      %53 = sbr.rel (0) target = $region25
    $region24: #{mlp_forward.1} parent=1 // pred_region
      %54 = dma.done [#allocation5], 256
    $region25: #{mlp_forward.1} parent=1 // pred_fallthru
      _
    // Predicated region
    $region26: #{mlp_forward.1} parent=1 // pred_check
      _
    $region27: #{mlp_forward.1} parent=1 // pred_check_branch
      %56 = sbr.rel (0) target = $region29
    $region28: #{mlp_forward.1} parent=1 // pred_region
      %57 = dma.done [#allocation5], 8192
    $region29: #{mlp_forward.1} parent=1 // pred_fallthru
      _
    %v58 = vld [vmem:[#allocation2] sm:$0xff]
    %v59 = vld [vmem:[#allocation2 + $0x8] sm:$0xff]
    %v60 = vld [vmem:[#allocation4] sm:$0xff]
    %v61 = vld [vmem:[#allocation4 + $0x8] sm:$0xff]
    %v62 = vld [vmem:[%s3] sm:$0x1]
    %v63 = vlaneseq
    %v64 = vshrl.u32 %v63, 7
    %v65 = vsub.s32 0, %v64
    %v66 = vrot.slane %v62, %v65
    %vm67 = vcmask 130048
    %v69 = vsel %vm67, %v58, 0
    %v72 = vsel %vm67, %v59, 0
    %74 = vmatprep.subr.mxu0 0.0
    %75 = vmatpush1.msra.mxu0 %v60
    %76 = vmatprep.subr.mxu0 0.0
    %77 = vmatpush1.msra.mxu0 %v61
    %78 = vmatprep.subr.mxu0 0.0
    %79 = vmatpush1.msra.mxu0 0.0
    %80 = vmatprep.subr.mxu0 0.0
    %81 = vmatpush1.msra.mxu0 0.0
    %82 = vmatprep.subr.mxu0 0.0
    %83 = vmatpush1.msra.mxu0 0.0
    %84 = vmatprep.subr.mxu0 0.0
    %85 = vmatpush1.msra.mxu0 0.0
    %86 = vmatprep.subr.mxu0 0.0
    %87 = vmatpush1.msra.mxu0 0.0
    %88 = vmatprep.subr.mxu0 0.0
    %89 = vmatpush1.msra.mxu0 0.0
    %90 = vmatprep.subr.mxu0 0.0
    %91 = vmatpush1.msra.mxu0 0.0
    %92 = vmatprep.subr.mxu0 0.0
    %93 = vmatpush1.msra.mxu0 0.0
    %94 = vmatprep.subr.mxu0 0.0
    %95 = vmatpush1.msra.mxu0 0.0
    %96 = vmatprep.subr.mxu0 0.0
    %97 = vmatpush1.msra.mxu0 0.0
    %98 = vmatprep.subr.mxu0 0.0
    %99 = vmatpush1.msra.mxu0 0.0
    %100 = vmatprep.subr.mxu0 0.0
    %101 = vmatpush1.msra.mxu0 0.0
    %102 = vmatprep.subr.mxu0 0.0
    %103 = vmatpush1.msra.mxu0 0.0
    %104 = vmatprep.subr.mxu0 0.0
    %105 = vmatpush1.msra.mxu0 0.0
    %106 = vmatprep.subr.mxu0 0.0
    %107 = vmatpush1.msra.mxu0 0.0
    %108 = vmatprep.subr.mxu0 0.0
    %109 = vmatpush1.msra.mxu0 0.0
    %110 = vmatprep.subr.mxu0 0.0
    %111 = vmatpush1.msra.mxu0 0.0
    %112 = vmatprep.subr.mxu0 0.0
    %113 = vmatpush1.msra.mxu0 0.0
    %114 = vmatprep.subr.mxu0 0.0
    %115 = vmatpush1.msra.mxu0 0.0
    %116 = vmatprep.subr.mxu0 0.0
    %117 = vmatpush1.msra.mxu0 0.0
    %118 = vmatprep.subr.mxu0 0.0
    %119 = vmatpush1.msra.mxu0 0.0
    %120 = vmatprep.subr.mxu0 0.0
    %121 = vmatpush1.msra.mxu0 0.0
    %122 = vmatprep.subr.mxu0 0.0
    %123 = vmatpush1.msra.mxu0 0.0
    %124 = vmatprep.subr.mxu0 0.0
    %125 = vmatpush1.msra.mxu0 0.0
    %126 = vmatprep.subr.mxu0 0.0
    %127 = vmatpush1.msra.mxu0 0.0
    %128 = vmatprep.subr.mxu0 0.0
    %129 = vmatpush1.msra.mxu0 0.0
    %130 = vmatprep.subr.mxu0 0.0
    %131 = vmatpush1.msra.mxu0 0.0
    %132 = vmatprep.subr.mxu0 0.0
    %133 = vmatpush1.msra.mxu0 0.0
    %134 = vmatprep.subr.mxu0 0.0
    %135 = vmatpush1.msra.mxu0 0.0
    %136 = vmatprep.subr.mxu0 0.0
    %137 = vmatpush1.msra.mxu0 0.0
    %138 = vmatprep.mubr.f32.mxu0 0.0
    %139 = vmatmul.mubr.f32.gmra.mrb[0].mxu0 %v69
    %v140 = vpop.f32.mrb[0].mxu0
    %v141 = vadd.f32 %v66, %v140
    %v142 = vpop.f32.mrb[0].mxu0
    %143 = vmatprep.mubr.f32.mxu0 0.0
    %144 = vmatmul.mubr.f32.gmra.mrb[0].mxu0 %v72
    %v145 = vpop.f32.mrb[0].mxu0
    %v146 = vadd.f32 %v66, %v145
    %v147 = vpop.f32.mrb[0].mxu0
    %148 = vdwg.mxu0
    %v149 = vmax.f32 %v141, 0.0
    %v150 = vmax.f32 %v146, 0.0
    %v151 = vld [vmem:[#allocation6] sm:$0xff]
    %v152 = vld [vmem:[#allocation6 + $0x8] sm:$0xff]
    %v153 = vld [vmem:[#allocation6 + $0x10] sm:$0xff]
    %v154 = vld [vmem:[#allocation6 + $0x18] sm:$0xff]
    %v155 = vld [vmem:[#allocation6 + $0x20] sm:$0xff]
    %v156 = vld [vmem:[#allocation6 + $0x28] sm:$0xff]
    %v157 = vld [vmem:[#allocation6 + $0x30] sm:$0xff]
    %v158 = vld [vmem:[#allocation6 + $0x38] sm:$0xff]
    %v159 = vld [vmem:[#allocation6 + $0x40] sm:$0xff]
    %v160 = vld [vmem:[#allocation6 + $0x48] sm:$0xff]
    %v161 = vld [vmem:[#allocation6 + $0x50] sm:$0xff]
    %v162 = vld [vmem:[#allocation6 + $0x58] sm:$0xff]
    %v163 = vld [vmem:[#allocation6 + $0x60] sm:$0xff]
    %v164 = vld [vmem:[#allocation6 + $0x68] sm:$0xff]
    %v165 = vld [vmem:[#allocation6 + $0x70] sm:$0xff]
    %v166 = vld [vmem:[#allocation6 + $0x78] sm:$0xff]
    %v167 = vld [vmem:[%s3 + $0x1] sm:$0x1]
    %v168 = vlaneseq
    %v169 = vshrl.u32 %v168, 7
    %v170 = vsub.s32 0, %v169
    %v171 = vrot.slane %v167, %v170
    %172 = vmatprep.subr.mxu0 0.0
    %173 = vmatpush1.msra.mxu0 %v151
    %174 = vmatprep.subr.mxu0 0.0
    %175 = vmatpush1.msra.mxu0 %v152
    %176 = vmatprep.subr.mxu0 0.0
    %177 = vmatpush1.msra.mxu0 %v153
    %178 = vmatprep.subr.mxu0 0.0
    %179 = vmatpush1.msra.mxu0 %v154
    %180 = vmatprep.subr.mxu0 0.0
    %181 = vmatpush1.msra.mxu0 %v155
    %182 = vmatprep.subr.mxu0 0.0
    %183 = vmatpush1.msra.mxu0 %v156
    %184 = vmatprep.subr.mxu0 0.0
    %185 = vmatpush1.msra.mxu0 %v157
    %186 = vmatprep.subr.mxu0 0.0
    %187 = vmatpush1.msra.mxu0 %v158
    %188 = vmatprep.subr.mxu0 0.0
    %189 = vmatpush1.msra.mxu0 %v159
    %190 = vmatprep.subr.mxu0 0.0
    %191 = vmatpush1.msra.mxu0 %v160
    %192 = vmatprep.subr.mxu0 0.0
    %193 = vmatpush1.msra.mxu0 %v161
    %194 = vmatprep.subr.mxu0 0.0
    %195 = vmatpush1.msra.mxu0 %v162
    %196 = vmatprep.subr.mxu0 0.0
    %197 = vmatpush1.msra.mxu0 %v163
    %198 = vmatprep.subr.mxu0 0.0
    %199 = vmatpush1.msra.mxu0 %v164
    %200 = vmatprep.subr.mxu0 0.0
    %201 = vmatpush1.msra.mxu0 %v165
    %202 = vmatprep.subr.mxu0 0.0
    %203 = vmatpush1.msra.mxu0 %v166
    %204 = vmatprep.subr.mxu0 0.0
    %205 = vmatpush1.msra.mxu0 0.0
    %206 = vmatprep.subr.mxu0 0.0
    %207 = vmatpush1.msra.mxu0 0.0
    %208 = vmatprep.subr.mxu0 0.0
    %209 = vmatpush1.msra.mxu0 0.0
    %210 = vmatprep.subr.mxu0 0.0
    %211 = vmatpush1.msra.mxu0 0.0
    %212 = vmatprep.subr.mxu0 0.0
    %213 = vmatpush1.msra.mxu0 0.0
    %214 = vmatprep.subr.mxu0 0.0
    %215 = vmatpush1.msra.mxu0 0.0
    %216 = vmatprep.subr.mxu0 0.0
    %217 = vmatpush1.msra.mxu0 0.0
    %218 = vmatprep.subr.mxu0 0.0
    %219 = vmatpush1.msra.mxu0 0.0
    %220 = vmatprep.subr.mxu0 0.0
    %221 = vmatpush1.msra.mxu0 0.0
    %222 = vmatprep.subr.mxu0 0.0
    %223 = vmatpush1.msra.mxu0 0.0
    %224 = vmatprep.subr.mxu0 0.0
    %225 = vmatpush1.msra.mxu0 0.0
    %226 = vmatprep.subr.mxu0 0.0
    %227 = vmatpush1.msra.mxu0 0.0
    %228 = vmatprep.subr.mxu0 0.0
    %229 = vmatpush1.msra.mxu0 0.0
    %230 = vmatprep.subr.mxu0 0.0
    %231 = vmatpush1.msra.mxu0 0.0
    %232 = vmatprep.subr.mxu0 0.0
    %233 = vmatpush1.msra.mxu0 0.0
    %234 = vmatprep.subr.mxu0 0.0
    %235 = vmatpush1.msra.mxu0 0.0
    %236 = vmatprep.mubr.f32.mxu0 0.0
    %237 = vmatmul.mubr.f32.gmra.mrb[0].mxu0 %v149
    %v238 = vpop.f32.mrb[0].mxu0
    %v239 = vadd.f32 %v171, %v238
    %v240 = vpop.f32.mrb[0].mxu0
    %241 = vmatprep.mubr.f32.mxu0 0.0
    %242 = vmatmul.mubr.f32.gmra.mrb[0].mxu0 %v150
    %v243 = vpop.f32.mrb[0].mxu0
    %v244 = vadd.f32 %v171, %v243
    %v245 = vpop.f32.mrb[0].mxu0
    %246 = vdwg.mxu0
    %v247 = vmax.f32 %v239, 0.0
    %v248 = vmax.f32 %v244, 0.0
    %v249 = vld [vmem:[#allocation6 + $0x80] sm:$0xff]
    %v250 = vld [vmem:[#allocation6 + $0x88] sm:$0xff]
    %v251 = vld [vmem:[#allocation6 + $0x90] sm:$0xff]
    %v252 = vld [vmem:[#allocation6 + $0x98] sm:$0xff]
    %v253 = vld [vmem:[#allocation6 + $0xa0] sm:$0xff]
    %v254 = vld [vmem:[#allocation6 + $0xa8] sm:$0xff]
    %v255 = vld [vmem:[#allocation6 + $0xb0] sm:$0xff]
    %v256 = vld [vmem:[#allocation6 + $0xb8] sm:$0xff]
    %v257 = vld [vmem:[#allocation6 + $0xc0] sm:$0xff]
    %v258 = vld [vmem:[#allocation6 + $0xc8] sm:$0xff]
    %v259 = vld [vmem:[#allocation6 + $0xd0] sm:$0xff]
    %v260 = vld [vmem:[#allocation6 + $0xd8] sm:$0xff]
    %v261 = vld [vmem:[#allocation6 + $0xe0] sm:$0xff]
    %v262 = vld [vmem:[#allocation6 + $0xe8] sm:$0xff]
    %v263 = vld [vmem:[#allocation6 + $0xf0] sm:$0xff]
    %v264 = vld [vmem:[#allocation6 + $0xf8] sm:$0xff]
    %v265 = vld [vmem:[%s3 + $0x2] sm:$0x1]
    %v266 = vlaneseq
    %v267 = vshrl.u32 %v266, 7
    %v268 = vsub.s32 0, %v267
    %v269 = vrot.slane %v265, %v268
    %270 = vmatprep.subr.mxu0 0.0
    %271 = vmatpush1.msra.mxu0 %v249
    %272 = vmatprep.subr.mxu0 0.0
    %273 = vmatpush1.msra.mxu0 %v250
    %274 = vmatprep.subr.mxu0 0.0
    %275 = vmatpush1.msra.mxu0 %v251
    %276 = vmatprep.subr.mxu0 0.0
    %277 = vmatpush1.msra.mxu0 %v252
    %278 = vmatprep.subr.mxu0 0.0
    %279 = vmatpush1.msra.mxu0 %v253
    %280 = vmatprep.subr.mxu0 0.0
    %281 = vmatpush1.msra.mxu0 %v254
    %282 = vmatprep.subr.mxu0 0.0
    %283 = vmatpush1.msra.mxu0 %v255
    %284 = vmatprep.subr.mxu0 0.0
    %285 = vmatpush1.msra.mxu0 %v256
    %286 = vmatprep.subr.mxu0 0.0
    %287 = vmatpush1.msra.mxu0 %v257
    %288 = vmatprep.subr.mxu0 0.0
    %289 = vmatpush1.msra.mxu0 %v258
    %290 = vmatprep.subr.mxu0 0.0
    %291 = vmatpush1.msra.mxu0 %v259
    %292 = vmatprep.subr.mxu0 0.0
    %293 = vmatpush1.msra.mxu0 %v260
    %294 = vmatprep.subr.mxu0 0.0
    %295 = vmatpush1.msra.mxu0 %v261
    %296 = vmatprep.subr.mxu0 0.0
    %297 = vmatpush1.msra.mxu0 %v262
    %298 = vmatprep.subr.mxu0 0.0
    %299 = vmatpush1.msra.mxu0 %v263
    %300 = vmatprep.subr.mxu0 0.0
    %301 = vmatpush1.msra.mxu0 %v264
    %302 = vmatprep.subr.mxu0 0.0
    %303 = vmatpush1.msra.mxu0 0.0
    %304 = vmatprep.subr.mxu0 0.0
    %305 = vmatpush1.msra.mxu0 0.0
    %306 = vmatprep.subr.mxu0 0.0
    %307 = vmatpush1.msra.mxu0 0.0
    %308 = vmatprep.subr.mxu0 0.0
    %309 = vmatpush1.msra.mxu0 0.0
    %310 = vmatprep.subr.mxu0 0.0
    %311 = vmatpush1.msra.mxu0 0.0
    %312 = vmatprep.subr.mxu0 0.0
    %313 = vmatpush1.msra.mxu0 0.0
    %314 = vmatprep.subr.mxu0 0.0
    %315 = vmatpush1.msra.mxu0 0.0
    %316 = vmatprep.subr.mxu0 0.0
    %317 = vmatpush1.msra.mxu0 0.0
    %318 = vmatprep.subr.mxu0 0.0
    %319 = vmatpush1.msra.mxu0 0.0
    %320 = vmatprep.subr.mxu0 0.0
    %321 = vmatpush1.msra.mxu0 0.0
    %322 = vmatprep.subr.mxu0 0.0
    %323 = vmatpush1.msra.mxu0 0.0
    %324 = vmatprep.subr.mxu0 0.0
    %325 = vmatpush1.msra.mxu0 0.0
    %326 = vmatprep.subr.mxu0 0.0
    %327 = vmatpush1.msra.mxu0 0.0
    %328 = vmatprep.subr.mxu0 0.0
    %329 = vmatpush1.msra.mxu0 0.0
    %330 = vmatprep.subr.mxu0 0.0
    %331 = vmatpush1.msra.mxu0 0.0
    %332 = vmatprep.subr.mxu0 0.0
    %333 = vmatpush1.msra.mxu0 0.0
    %334 = vmatprep.mubr.f32.mxu0 0.0
    %335 = vmatmul.mubr.f32.gmra.mrb[0].mxu0 %v247
    %v336 = vpop.f32.mrb[0].mxu0
    %v337 = vadd.f32 %v269, %v336
    %v338 = vpop.f32.mrb[0].mxu0
    %339 = vmatprep.mubr.f32.mxu0 0.0
    %340 = vmatmul.mubr.f32.gmra.mrb[0].mxu0 %v248
    %v341 = vpop.f32.mrb[0].mxu0
    %v342 = vadd.f32 %v269, %v341
    %v343 = vpop.f32.mrb[0].mxu0
    %344 = vdwg.mxu0
    %v345 = vmax.f32 %v337, 0.0
    %v346 = vmax.f32 %v342, 0.0
    %v347 = vld [vmem:[#allocation6 + $0x100] sm:$0xff]
    %v348 = vld [vmem:[#allocation6 + $0x108] sm:$0xff]
    %v349 = vld [vmem:[#allocation6 + $0x110] sm:$0xff]
    %v350 = vld [vmem:[#allocation6 + $0x118] sm:$0xff]
    %v351 = vld [vmem:[#allocation6 + $0x120] sm:$0xff]
    %v352 = vld [vmem:[#allocation6 + $0x128] sm:$0xff]
    %v353 = vld [vmem:[#allocation6 + $0x130] sm:$0xff]
    %v354 = vld [vmem:[#allocation6 + $0x138] sm:$0xff]
    %v355 = vld [vmem:[#allocation6 + $0x140] sm:$0xff]
    %v356 = vld [vmem:[#allocation6 + $0x148] sm:$0xff]
    %v357 = vld [vmem:[#allocation6 + $0x150] sm:$0xff]
    %v358 = vld [vmem:[#allocation6 + $0x158] sm:$0xff]
    %v359 = vld [vmem:[#allocation6 + $0x160] sm:$0xff]
    %v360 = vld [vmem:[#allocation6 + $0x168] sm:$0xff]
    %v361 = vld [vmem:[#allocation6 + $0x170] sm:$0xff]
    %v362 = vld [vmem:[#allocation6 + $0x178] sm:$0xff]
    %v363 = vld [vmem:[%s3 + $0x3] sm:$0x1]
    %v364 = vlaneseq
    %v365 = vshrl.u32 %v364, 7
    %v366 = vsub.s32 0, %v365
    %v367 = vrot.slane %v363, %v366
    %368 = vmatprep.subr.mxu0 0.0
    %369 = vmatpush1.msra.mxu0 %v347
    %370 = vmatprep.subr.mxu0 0.0
    %371 = vmatpush1.msra.mxu0 %v348
    %372 = vmatprep.subr.mxu0 0.0
    %373 = vmatpush1.msra.mxu0 %v349
    %374 = vmatprep.subr.mxu0 0.0
    %375 = vmatpush1.msra.mxu0 %v350
    %376 = vmatprep.subr.mxu0 0.0
    %377 = vmatpush1.msra.mxu0 %v351
    %378 = vmatprep.subr.mxu0 0.0
    %379 = vmatpush1.msra.mxu0 %v352
    %380 = vmatprep.subr.mxu0 0.0
    %381 = vmatpush1.msra.mxu0 %v353
    %382 = vmatprep.subr.mxu0 0.0
    %383 = vmatpush1.msra.mxu0 %v354
    %384 = vmatprep.subr.mxu0 0.0
    %385 = vmatpush1.msra.mxu0 %v355
    %386 = vmatprep.subr.mxu0 0.0
    %387 = vmatpush1.msra.mxu0 %v356
    %388 = vmatprep.subr.mxu0 0.0
    %389 = vmatpush1.msra.mxu0 %v357
    %390 = vmatprep.subr.mxu0 0.0
    %391 = vmatpush1.msra.mxu0 %v358
    %392 = vmatprep.subr.mxu0 0.0
    %393 = vmatpush1.msra.mxu0 %v359
    %394 = vmatprep.subr.mxu0 0.0
    %395 = vmatpush1.msra.mxu0 %v360
    %396 = vmatprep.subr.mxu0 0.0
    %397 = vmatpush1.msra.mxu0 %v361
    %398 = vmatprep.subr.mxu0 0.0
    %399 = vmatpush1.msra.mxu0 %v362
    %400 = vmatprep.subr.mxu0 0.0
    %401 = vmatpush1.msra.mxu0 0.0
    %402 = vmatprep.subr.mxu0 0.0
    %403 = vmatpush1.msra.mxu0 0.0
    %404 = vmatprep.subr.mxu0 0.0
    %405 = vmatpush1.msra.mxu0 0.0
    %406 = vmatprep.subr.mxu0 0.0
    %407 = vmatpush1.msra.mxu0 0.0
    %408 = vmatprep.subr.mxu0 0.0
    %409 = vmatpush1.msra.mxu0 0.0
    %410 = vmatprep.subr.mxu0 0.0
    %411 = vmatpush1.msra.mxu0 0.0
    %412 = vmatprep.subr.mxu0 0.0
    %413 = vmatpush1.msra.mxu0 0.0
    %414 = vmatprep.subr.mxu0 0.0
    %415 = vmatpush1.msra.mxu0 0.0
    %416 = vmatprep.subr.mxu0 0.0
    %417 = vmatpush1.msra.mxu0 0.0
    %418 = vmatprep.subr.mxu0 0.0
    %419 = vmatpush1.msra.mxu0 0.0
    %420 = vmatprep.subr.mxu0 0.0
    %421 = vmatpush1.msra.mxu0 0.0
    %422 = vmatprep.subr.mxu0 0.0
    %423 = vmatpush1.msra.mxu0 0.0
    %424 = vmatprep.subr.mxu0 0.0
    %425 = vmatpush1.msra.mxu0 0.0
    %426 = vmatprep.subr.mxu0 0.0
    %427 = vmatpush1.msra.mxu0 0.0
    %428 = vmatprep.subr.mxu0 0.0
    %429 = vmatpush1.msra.mxu0 0.0
    %430 = vmatprep.subr.mxu0 0.0
    %431 = vmatpush1.msra.mxu0 0.0
    %432 = vmatprep.mubr.f32.mxu0 0.0
    %433 = vmatmul.mubr.f32.gmra.mrb[0].mxu0 %v345
    %v434 = vpop.f32.mrb[0].mxu0
    %v435 = vadd.f32 %v367, %v434
    %v436 = vpop.f32.mrb[0].mxu0
    %437 = vmatprep.mubr.f32.mxu0 0.0
    %438 = vmatmul.mubr.f32.gmra.mrb[0].mxu0 %v346
    %v439 = vpop.f32.mrb[0].mxu0
    %v440 = vadd.f32 %v367, %v439
    %v441 = vpop.f32.mrb[0].mxu0
    %442 = vdwg.mxu0
    %v443 = vmax.f32 %v435, 0.0
    %v444 = vmax.f32 %v440, 0.0
    %v445 = vld [vmem:[#allocation6 + $0x180] sm:$0xff]
    %v446 = vld [vmem:[#allocation6 + $0x188] sm:$0xff]
    %v447 = vld [vmem:[#allocation6 + $0x190] sm:$0xff]
    %v448 = vld [vmem:[#allocation6 + $0x198] sm:$0xff]
    %v449 = vld [vmem:[#allocation6 + $0x1a0] sm:$0xff]
    %v450 = vld [vmem:[#allocation6 + $0x1a8] sm:$0xff]
    %v451 = vld [vmem:[#allocation6 + $0x1b0] sm:$0xff]
    %v452 = vld [vmem:[#allocation6 + $0x1b8] sm:$0xff]
    %v453 = vld [vmem:[#allocation6 + $0x1c0] sm:$0xff]
    %v454 = vld [vmem:[#allocation6 + $0x1c8] sm:$0xff]
    %v455 = vld [vmem:[#allocation6 + $0x1d0] sm:$0xff]
    %v456 = vld [vmem:[#allocation6 + $0x1d8] sm:$0xff]
    %v457 = vld [vmem:[#allocation6 + $0x1e0] sm:$0xff]
    %v458 = vld [vmem:[#allocation6 + $0x1e8] sm:$0xff]
    %v459 = vld [vmem:[#allocation6 + $0x1f0] sm:$0xff]
    %v460 = vld [vmem:[#allocation6 + $0x1f8] sm:$0xff]
    %v461 = vld [vmem:[%s3 + $0x4] sm:$0x1]
    %v462 = vlaneseq
    %v463 = vshrl.u32 %v462, 7
    %v464 = vsub.s32 0, %v463
    %v465 = vrot.slane %v461, %v464
    %466 = vmatprep.subr.mxu0 0.0
    %467 = vmatpush1.msra.mxu0 %v445
    %468 = vmatprep.subr.mxu0 0.0
    %469 = vmatpush1.msra.mxu0 %v446
    %470 = vmatprep.subr.mxu0 0.0
    %471 = vmatpush1.msra.mxu0 %v447
    %472 = vmatprep.subr.mxu0 0.0
    %473 = vmatpush1.msra.mxu0 %v448
    %474 = vmatprep.subr.mxu0 0.0
    %475 = vmatpush1.msra.mxu0 %v449
    %476 = vmatprep.subr.mxu0 0.0
    %477 = vmatpush1.msra.mxu0 %v450
    %478 = vmatprep.subr.mxu0 0.0
    %479 = vmatpush1.msra.mxu0 %v451
    %480 = vmatprep.subr.mxu0 0.0
    %481 = vmatpush1.msra.mxu0 %v452
    %482 = vmatprep.subr.mxu0 0.0
    %483 = vmatpush1.msra.mxu0 %v453
    %484 = vmatprep.subr.mxu0 0.0
    %485 = vmatpush1.msra.mxu0 %v454
    %486 = vmatprep.subr.mxu0 0.0
    %487 = vmatpush1.msra.mxu0 %v455
    %488 = vmatprep.subr.mxu0 0.0
    %489 = vmatpush1.msra.mxu0 %v456
    %490 = vmatprep.subr.mxu0 0.0
    %491 = vmatpush1.msra.mxu0 %v457
    %492 = vmatprep.subr.mxu0 0.0
    %493 = vmatpush1.msra.mxu0 %v458
    %494 = vmatprep.subr.mxu0 0.0
    %495 = vmatpush1.msra.mxu0 %v459
    %496 = vmatprep.subr.mxu0 0.0
    %497 = vmatpush1.msra.mxu0 %v460
    %498 = vmatprep.subr.mxu0 0.0
    %499 = vmatpush1.msra.mxu0 0.0
    %500 = vmatprep.subr.mxu0 0.0
    %501 = vmatpush1.msra.mxu0 0.0
    %502 = vmatprep.subr.mxu0 0.0
    %503 = vmatpush1.msra.mxu0 0.0
    %504 = vmatprep.subr.mxu0 0.0
    %505 = vmatpush1.msra.mxu0 0.0
    %506 = vmatprep.subr.mxu0 0.0
    %507 = vmatpush1.msra.mxu0 0.0
    %508 = vmatprep.subr.mxu0 0.0
    %509 = vmatpush1.msra.mxu0 0.0
    %510 = vmatprep.subr.mxu0 0.0
    %511 = vmatpush1.msra.mxu0 0.0
    %512 = vmatprep.subr.mxu0 0.0
    %513 = vmatpush1.msra.mxu0 0.0
    %514 = vmatprep.subr.mxu0 0.0
    %515 = vmatpush1.msra.mxu0 0.0
    %516 = vmatprep.subr.mxu0 0.0
    %517 = vmatpush1.msra.mxu0 0.0
    %518 = vmatprep.subr.mxu0 0.0
    %519 = vmatpush1.msra.mxu0 0.0
    %520 = vmatprep.subr.mxu0 0.0
    %521 = vmatpush1.msra.mxu0 0.0
    %522 = vmatprep.subr.mxu0 0.0
    %523 = vmatpush1.msra.mxu0 0.0
    %524 = vmatprep.subr.mxu0 0.0
    %525 = vmatpush1.msra.mxu0 0.0
    %526 = vmatprep.subr.mxu0 0.0
    %527 = vmatpush1.msra.mxu0 0.0
    %528 = vmatprep.subr.mxu0 0.0
    %529 = vmatpush1.msra.mxu0 0.0
    %530 = vmatprep.mubr.f32.mxu0 0.0
    %531 = vmatmul.mubr.f32.gmra.mrb[0].mxu0 %v443
    %v532 = vpop.f32.mrb[0].mxu0
    %v533 = vadd.f32 %v465, %v532
    %v534 = vpop.f32.mrb[0].mxu0
    %535 = vmatprep.mubr.f32.mxu0 0.0
    %536 = vmatmul.mubr.f32.gmra.mrb[0].mxu0 %v444
    %v537 = vpop.f32.mrb[0].mxu0
    %v538 = vadd.f32 %v465, %v537
    %v539 = vpop.f32.mrb[0].mxu0
    %540 = vdwg.mxu0
    %vm541 = vcmask 64512
    %542 = vst.msk [vmem:[%s4] sm:$0xff] %vm541, %v533
    %543 = vst.msk [vmem:[%s4 + $0x8] sm:$0xff] %vm541, %v538
    // Predicated region
    $region30: #{mlp_forward.1} parent=1 // pred_check
      _
    $region31: #{mlp_forward.1} parent=1 // pred_check_branch
      %545 = sbr.rel (0) target = $region33
    $region32: #{mlp_forward.1} parent=1 // pred_region
      _
    $region33: #{mlp_forward.1} parent=1 // pred_fallthru
      _
    // Predicated region
    $region34: #{mlp_forward.1} parent=1 // pred_check
      _
    $region35: #{mlp_forward.1} parent=1 // pred_check_branch
      %547 = sbr.rel (0) target = $region37
    $region36: #{mlp_forward.1} parent=1 // pred_region
      _
    $region37: #{mlp_forward.1} parent=1 // pred_fallthru
      _
    %548 = vsyncpa [#allocation3], 1
    %549 = vsyncpa [#allocation5], 1

</llo_original>
